<compile_context>
chip_gen: v5e
topology: v5e:2x2
jax: 0.10.0
libtpu: 0.0.40
codegen_flags: <defaults>
</compile_context>

<pallas_src>
import functools

import jax
import jax.numpy as jnp
from jax.experimental import pallas as pl
from jax.experimental.pallas import tpu as pltpu


def _qwk_kernel(n_valid_ref, preds_ref, labels_ref, out_ref,
                num_acc, psum_acc, wsum_acc, *, eps):
    i = pl.program_id(0)
    C, TR, L = preds_ref.shape          # L == 128 (lane axis)

    @pl.when(i == 0)
    def _init():
        num_acc[...] = jnp.zeros_like(num_acc)
        psum_acc[...] = jnp.zeros_like(psum_acc)
        wsum_acc[...] = jnp.zeros_like(wsum_acc)

    def reduce_rows(x):
        # (TR, L) -> (1, L): sublane-only reduction, lanes stay dense.
        return jnp.sum(x, axis=0, keepdims=True)

    def accumulate(valid):
        # valid: None (full tile fast path) or (TR, L) bool mask.
        logits = [preds_ref[c].astype(jnp.float32) for c in range(C)]
        if valid is not None:
            # Zero BEFORE max/exp so garbage lanes never reach exp.
            logits = [jnp.where(valid, x, 0.0) for x in logits]

        # Softmax over classes == elementwise ops across C dense tiles.
        m = logits[0]
        for c in range(1, C):
            m = jnp.maximum(m, logits[c])
        e = [jnp.exp(x - m) for x in logits]
        s = e[0]
        for c in range(1, C):
            s = s + e[c]
        inv = 1.0 / s                                   # exact (tolerance)

        lab = labels_ref[...].astype(jnp.float32)       # (TR, L)
        num_part = None
        for c in range(C):
            pc = e[c] * inv                             # softmax[:, c]
            d = lab - jnp.float32(c)
            w = d * d                                   # (lab - c)^2
            if valid is not None:
                pc = jnp.where(valid, pc, 0.0)
                w = jnp.where(valid, w, 0.0)
            term = w * pc
            num_part = term if num_part is None else num_part + term
            psum_acc[c] = psum_acc[c] + reduce_rows(pc)
            wsum_acc[c] = wsum_acc[c] + reduce_rows(w)
        num_acc[...] = num_acc[...] + reduce_rows(num_part)

    n_valid = n_valid_ref[0]
    tile_start = i * (TR * L)
    is_full = (tile_start + TR * L) <= n_valid

    @pl.when(is_full)
    def _full_tile():
        accumulate(None)

    @pl.when(jnp.logical_not(is_full))
    def _ragged_tile():
        row = jax.lax.broadcasted_iota(jnp.int32, (TR, L), 0)
        lane = jax.lax.broadcasted_iota(jnp.int32, (TR, L), 1)
        idx = tile_start + row * L + lane
        accumulate(idx < n_valid)

    @pl.when(i == pl.num_programs(0) - 1)
    def _finalize():
        def sum11(x):
            return jnp.sum(jnp.sum(x, axis=1, keepdims=True),
                           axis=0, keepdims=True)
        num = sum11(num_acc[...])                       # (W*O).sum()
        osum = jnp.zeros((1, 1), jnp.float32)
        wesum = jnp.zeros((1, 1), jnp.float32)
        for c in range(C):
            pc = sum11(psum_acc[c])
            wc = sum11(wsum_acc[c])
            osum = osum + pc
            wesum = wesum + pc * wc
        den = wesum / osum + eps                        # (W*E).sum() + eps
        out_ref[...] = num / den


def qwk_loss_class_major(preds_cm, labels_pad, n_valid=None, n_classes=3,
                         eps=1e-7, tile_rows=2048, vmem_limit_bytes=None):
    """Zero-copy fast path.

    preds_cm:   (C, Npad) logits, class-major, Npad % 128 == 0
    labels_pad: (Npad,)   integer class indices (padding values arbitrary)
    n_valid:    true number of samples (<= Npad); defaults to Npad
    """
    C, npad = preds_cm.shape
    assert C == n_classes
    assert npad % 128 == 0, "class-major path expects a 128-padded batch"
    assert labels_pad.shape == (npad,)
    R = npad // 128
    if n_valid is None:
        n_valid = npad

    preds3 = preds_cm.reshape(C, R, 128)                      # free view
    if labels_pad.dtype != jnp.int32:
        labels_pad = labels_pad.astype(jnp.int32)
    labels2 = labels_pad.reshape(R, 128)                      # free view

    tr = max(8, (int(tile_rows) // 8) * 8)                    # multiple of 8
    tr = min(tr, R)                                           # or full extent
    grid = (pl.cdiv(R, tr),)

    kernel = functools.partial(_qwk_kernel, eps=float(eps))

    out = pl.pallas_call(
        kernel,
        out_shape=jax.ShapeDtypeStruct((1, 1), jnp.float32),
        grid_spec=pltpu.PrefetchScalarGridSpec(
            num_scalar_prefetch=1,
            grid=grid,
            in_specs=[
                pl.BlockSpec((C, tr, 128), lambda i, n: (0, i, 0)),  # preds
                pl.BlockSpec((tr, 128), lambda i, n: (i, 0)),        # labels
            ],
            out_specs=pl.BlockSpec((1, 1), lambda i, n: (0, 0)),
            scratch_shapes=[
                pltpu.VMEM((1, 128), jnp.float32),        # num partial
                pltpu.VMEM((C, 1, 128), jnp.float32),     # psum partials
                pltpu.VMEM((C, 1, 128), jnp.float32),     # wsum partials
            ],
        ),
        compiler_params=pltpu.CompilerParams(
            dimension_semantics=("arbitrary",),
            vmem_limit_bytes=vmem_limit_bytes),
    )(jnp.asarray([n_valid], dtype=jnp.int32), preds3, labels2)
    return out[0, 0]


def qwk_loss(preds, labels, n_classes=3, eps=1e-7, tile_rows=2048):
    """Compatibility wrapper matching QWKLoss.forward.

    preds:  (N, C) float32/bfloat16 logits
    labels: (N,)   integer class indices in [0, n_classes)

    NOTE: this path pays one relayout copy (pad + transpose).  Producers
    that can emit class-major, 128-padded logits should call
    `qwk_loss_class_major` directly (no extra HBM pass).
    """
    N, C = preds.shape
    assert C == n_classes
    npad = pl.cdiv(N, 128) * 128
    if npad != N:
        preds = jnp.pad(preds, ((0, npad - N), (0, 0)))
        labels = jnp.pad(labels, ((0, npad - N),))
    preds_cm = preds.T                                        # (C, npad)
    return qwk_loss_class_major(preds_cm, labels, n_valid=N,
                                n_classes=n_classes, eps=eps,
                                tile_rows=tile_rows)


def qwk_loss_ref(preds, labels, n_classes=3, eps=1e-7):
    """Pure-JAX reference mirroring the PyTorch module."""
    ii = jnp.arange(n_classes, dtype=jnp.float32)
    W = (ii[:, None] - ii[None, :]) ** 2
    p = jax.nn.softmax(preds.astype(jnp.float32), axis=1)
    onehot = jax.nn.one_hot(labels, n_classes, dtype=jnp.float32)
    O = onehot.T @ p
    E = (onehot.sum(0)[:, None] * p.sum(0)[None, :]) / O.sum()
    return (W * O).sum() / ((W * E).sum() + eps)


if __name__ == "__main__":
    key = jax.random.PRNGKey(0)
    kp, kl, kp2, kl2 = jax.random.split(key, 4)

    # Test 1: small, N NOT a multiple of 128 -> exercises the ragged/masked
    # path and the (N, C) compatibility wrapper.
    N, C = 200, 3
    preds = jax.random.normal(kp, (N, C), dtype=jnp.float32)
    labels = jax.random.randint(kl, (N,), 0, C, dtype=jnp.int32)

    loss = jax.block_until_ready(qwk_loss(preds, labels, n_classes=C))
    ref = qwk_loss_ref(preds, labels, n_classes=C)
    assert jnp.allclose(loss, ref, rtol=1e-5, atol=1e-6), (loss, ref)

    # Also exercise the zero-copy class-major fast path on the same data.
    npad = pl.cdiv(N, 128) * 128
    preds_cm = jnp.pad(preds, ((0, npad - N), (0, 0))).T     # (C, npad)
    labels_pad = jnp.pad(labels, ((0, npad - N),))
    loss_cm = jax.block_until_ready(
        qwk_loss_class_major(preds_cm, labels_pad, n_valid=N, n_classes=C))
    assert jnp.allclose(loss_cm, ref, rtol=1e-5, atol=1e-6), (loss_cm, ref)

    # Test 2: N a multiple of 128 with multiple grid steps -> exercises the
    # unmasked full-tile fast path and cross-step accumulation.
    N2 = 2048
    preds2 = jax.random.normal(kp2, (N2, C), dtype=jnp.float32)
    labels2 = jax.random.randint(kl2, (N2,), 0, C, dtype=jnp.int32)
    loss2 = jax.block_until_ready(
        qwk_loss(preds2, labels2, n_classes=C, tile_rows=8))
    ref2 = qwk_loss_ref(preds2, labels2, n_classes=C)
    assert jnp.allclose(loss2, ref2, rtol=1e-5, atol=1e-6), (loss2, ref2)

    print("KERNEL_OK")
</pallas_src>

<mosaic_0001>
module attributes {stable_mosaic.version = 11 : i64} {
  func.func @_qwk_kernel(%arg0: i32, %arg1: memref<1xi32, #tpu.memory_space<smem>>, %arg2: memref<3x2x128xf32, #tpu.memory_space<vmem>>, %arg3: memref<2x128xi32, #tpu.memory_space<vmem>>, %arg4: memref<1x1xf32, #tpu.memory_space<vmem>>, %arg5: memref<1x128xf32, #tpu.memory_space<vmem>>, %arg6: memref<3x1x128xf32, #tpu.memory_space<vmem>>, %arg7: memref<3x1x128xf32, #tpu.memory_space<vmem>>) attributes {dimension_semantics = [#tpu.dimension_semantics<arbitrary>], iteration_bounds = array<i64: 1>, scalar_prefetch = 1 : i64, scratch_operands = 3 : i64, tpu.core_type = #tpu.core_type<tc>, window_params = [{transform_indices = @transform_0, window_bounds = array<i64: 3, 2, 128>}, {transform_indices = @transform_1, window_bounds = array<i64: 2, 128>}, {pipeline_mode = #tpu.pipeline_mode<synchronous>, transform_indices = @transform_2, window_bounds = array<i64: 1, 1>}]} {
    %c0_i32 = arith.constant 0 : i32
    %0 = arith.cmpi eq, %arg0, %c0_i32 : i32
    %1 = arith.extui %0 : i1 to i32
    %c0_i32_0 = arith.constant 0 : i32
    %2 = arith.cmpi ne, %1, %c0_i32_0 : i32
    scf.if %2 {
      %cst = arith.constant 0.000000e+00 : f32
      %15 = vector.broadcast %cst : f32 to vector<1x128xf32>
      %c0_6 = arith.constant 0 : index
      %c0_7 = arith.constant 0 : index
      %16 = vector.load %arg5[%c0_6, %c0_7] : memref<1x128xf32, #tpu.memory_space<vmem>>, vector<1x128xf32>
      tpu.vector_store %arg5[%c0_6, %c0_7], %15 {strides = array<i32>} : memref<1x128xf32, #tpu.memory_space<vmem>>, vector<1x128xf32>,
      %cst_8 = arith.constant 0.000000e+00 : f32
      %17 = vector.broadcast %cst_8 : f32 to vector<3x1x128xf32>
      %c0_9 = arith.constant 0 : index
      %c0_10 = arith.constant 0 : index
      %c0_11 = arith.constant 0 : index
      %18 = vector.load %arg6[%c0_9, %c0_10, %c0_11] : memref<3x1x128xf32, #tpu.memory_space<vmem>>, vector<3x1x128xf32>
      tpu.vector_store %arg6[%c0_9, %c0_10, %c0_11], %17 {strides = array<i32>} : memref<3x1x128xf32, #tpu.memory_space<vmem>>, vector<3x1x128xf32>,
      %cst_12 = arith.constant 0.000000e+00 : f32
      %19 = vector.broadcast %cst_12 : f32 to vector<3x1x128xf32>
      %c0_13 = arith.constant 0 : index
      %c0_14 = arith.constant 0 : index
      %c0_15 = arith.constant 0 : index
      %20 = vector.load %arg7[%c0_13, %c0_14, %c0_15] : memref<3x1x128xf32, #tpu.memory_space<vmem>>, vector<3x1x128xf32>
      tpu.vector_store %arg7[%c0_13, %c0_14, %c0_15], %19 {strides = array<i32>} : memref<3x1x128xf32, #tpu.memory_space<vmem>>, vector<3x1x128xf32>,
    } else {
    }
    %c0 = arith.constant 0 : index
    %3 = memref.load %arg1[%c0] : memref<1xi32, #tpu.memory_space<smem>>
    %c256_i32 = arith.constant 256 : i32
    %4 = arith.muli %arg0, %c256_i32 : i32
    %c256_i32_1 = arith.constant 256 : i32
    %5 = arith.addi %4, %c256_i32_1 : i32
    %6 = arith.cmpi sle, %5, %3 : i32
    %7 = arith.extui %6 : i1 to i32
    %c0_i32_2 = arith.constant 0 : i32
    %8 = arith.cmpi ne, %7, %c0_i32_2 : i32
    scf.if %8 {
      %c0_6 = arith.constant 0 : index
      %c0_7 = arith.constant 0 : index
      %c0_8 = arith.constant 0 : index
      %15 = vector.load %arg2[%c0_6, %c0_7, %c0_8] : memref<3x2x128xf32, #tpu.memory_space<vmem>>, vector<1x2x128xf32>
      %16 = vector.shape_cast %15 : vector<1x2x128xf32> to vector<2x128xf32>
      %c1 = arith.constant 1 : index
      %c0_9 = arith.constant 0 : index
      %c0_10 = arith.constant 0 : index
      %17 = vector.load %arg2[%c1, %c0_9, %c0_10] : memref<3x2x128xf32, #tpu.memory_space<vmem>>, vector<1x2x128xf32>
      %18 = vector.shape_cast %17 : vector<1x2x128xf32> to vector<2x128xf32>
      %c2 = arith.constant 2 : index
      %c0_11 = arith.constant 0 : index
      %c0_12 = arith.constant 0 : index
      %19 = vector.load %arg2[%c2, %c0_11, %c0_12] : memref<3x2x128xf32, #tpu.memory_space<vmem>>, vector<1x2x128xf32>
      %20 = vector.shape_cast %19 : vector<1x2x128xf32> to vector<2x128xf32>
      %21 = arith.maximumf %16, %18 : vector<2x128xf32>
      %22 = arith.maximumf %21, %20 : vector<2x128xf32>
      %23 = arith.subf %16, %22 : vector<2x128xf32>
      %24 = math.exp %23 : vector<2x128xf32>
      %25 = arith.subf %18, %22 : vector<2x128xf32>
      %26 = math.exp %25 : vector<2x128xf32>
      %27 = arith.subf %20, %22 : vector<2x128xf32>
      %28 = math.exp %27 : vector<2x128xf32>
      %29 = arith.addf %24, %26 : vector<2x128xf32>
      %30 = arith.addf %29, %28 : vector<2x128xf32>
      %cst = arith.constant 1.000000e+00 : f32
      %31 = vector.broadcast %cst : f32 to vector<2x128xf32>
      %32 = arith.divf %31, %30 : vector<2x128xf32>
      %c0_13 = arith.constant 0 : index
      %c0_14 = arith.constant 0 : index
      %33 = vector.load %arg3[%c0_13, %c0_14] : memref<2x128xi32, #tpu.memory_space<vmem>>, vector<2x128xi32>
      %34 = arith.sitofp %33 : vector<2x128xi32> to vector<2x128xf32>
      %35 = arith.mulf %24, %32 : vector<2x128xf32>
      %cst_15 = arith.constant 0.000000e+00 : f32
      %36 = vector.broadcast %cst_15 : f32 to vector<2x128xf32>
      %37 = arith.subf %34, %36 : vector<2x128xf32>
      %38 = arith.mulf %37, %37 : vector<2x128xf32>
      %39 = arith.mulf %38, %35 : vector<2x128xf32>
      %c0_16 = arith.constant 0 : index
      %c0_17 = arith.constant 0 : index
      %c0_18 = arith.constant 0 : index
      %40 = vector.load %arg6[%c0_16, %c0_17, %c0_18] : memref<3x1x128xf32, #tpu.memory_space<vmem>>, vector<1x1x128xf32>
      %41 = vector.shape_cast %40 : vector<1x1x128xf32> to vector<1x128xf32>
      %cst_19 = arith.constant dense<0.000000e+00> : vector<128xf32>
      %42 = vector.multi_reduction <add>, %35, %cst_19 [0] : vector<2x128xf32> to vector<128xf32>
      %43 = vector.shape_cast %42 : vector<128xf32> to vector<1x128xf32>
      %44 = arith.addf %41, %43 : vector<1x128xf32>
      %c0_20 = arith.constant 0 : index
      %c0_21 = arith.constant 0 : index
      %c0_22 = arith.constant 0 : index
      %45 = vector.load %arg6[%c0_20, %c0_21, %c0_22] : memref<3x1x128xf32, #tpu.memory_space<vmem>>, vector<1x1x128xf32>
      %46 = vector.shape_cast %45 : vector<1x1x128xf32> to vector<1x128xf32>
      %47 = vector.shape_cast %44 : vector<1x128xf32> to vector<1x1x128xf32>
      tpu.vector_store %arg6[%c0_20, %c0_21, %c0_22], %47 {strides = array<i32>} : memref<3x1x128xf32, #tpu.memory_space<vmem>>, vector<1x1x128xf32>,
      %c0_23 = arith.constant 0 : index
      %c0_24 = arith.constant 0 : index
      %c0_25 = arith.constant 0 : index
      %48 = vector.load %arg7[%c0_23, %c0_24, %c0_25] : memref<3x1x128xf32, #tpu.memory_space<vmem>>, vector<1x1x128xf32>
      %49 = vector.shape_cast %48 : vector<1x1x128xf32> to vector<1x128xf32>
      %cst_26 = arith.constant dense<0.000000e+00> : vector<128xf32>
      %50 = vector.multi_reduction <add>, %38, %cst_26 [0] : vector<2x128xf32> to vector<128xf32>
      %51 = vector.shape_cast %50 : vector<128xf32> to vector<1x128xf32>
      %52 = arith.addf %49, %51 : vector<1x128xf32>
      %c0_27 = arith.constant 0 : index
      %c0_28 = arith.constant 0 : index
      %c0_29 = arith.constant 0 : index
      %53 = vector.load %arg7[%c0_27, %c0_28, %c0_29] : memref<3x1x128xf32, #tpu.memory_space<vmem>>, vector<1x1x128xf32>
      %54 = vector.shape_cast %53 : vector<1x1x128xf32> to vector<1x128xf32>
      %55 = vector.shape_cast %52 : vector<1x128xf32> to vector<1x1x128xf32>
      tpu.vector_store %arg7[%c0_27, %c0_28, %c0_29], %55 {strides = array<i32>} : memref<3x1x128xf32, #tpu.memory_space<vmem>>, vector<1x1x128xf32>,
      %56 = arith.mulf %26, %32 : vector<2x128xf32>
      %cst_30 = arith.constant 1.000000e+00 : f32
      %57 = vector.broadcast %cst_30 : f32 to vector<2x128xf32>
      %58 = arith.subf %34, %57 : vector<2x128xf32>
      %59 = arith.mulf %58, %58 : vector<2x128xf32>
      %60 = arith.mulf %59, %56 : vector<2x128xf32>
      %61 = arith.addf %39, %60 : vector<2x128xf32>
      %c1_31 = arith.constant 1 : index
      %c0_32 = arith.constant 0 : index
      %c0_33 = arith.constant 0 : index
      %62 = vector.load %arg6[%c1_31, %c0_32, %c0_33] : memref<3x1x128xf32, #tpu.memory_space<vmem>>, vector<1x1x128xf32>
      %63 = vector.shape_cast %62 : vector<1x1x128xf32> to vector<1x128xf32>
      %cst_34 = arith.constant dense<0.000000e+00> : vector<128xf32>
      %64 = vector.multi_reduction <add>, %56, %cst_34 [0] : vector<2x128xf32> to vector<128xf32>
      %65 = vector.shape_cast %64 : vector<128xf32> to vector<1x128xf32>
      %66 = arith.addf %63, %65 : vector<1x128xf32>
      %c1_35 = arith.constant 1 : index
      %c0_36 = arith.constant 0 : index
      %c0_37 = arith.constant 0 : index
      %67 = vector.load %arg6[%c1_35, %c0_36, %c0_37] : memref<3x1x128xf32, #tpu.memory_space<vmem>>, vector<1x1x128xf32>
      %68 = vector.shape_cast %67 : vector<1x1x128xf32> to vector<1x128xf32>
      %69 = vector.shape_cast %66 : vector<1x128xf32> to vector<1x1x128xf32>
      tpu.vector_store %arg6[%c1_35, %c0_36, %c0_37], %69 {strides = array<i32>} : memref<3x1x128xf32, #tpu.memory_space<vmem>>, vector<1x1x128xf32>,
      %c1_38 = arith.constant 1 : index
      %c0_39 = arith.constant 0 : index
      %c0_40 = arith.constant 0 : index
      %70 = vector.load %arg7[%c1_38, %c0_39, %c0_40] : memref<3x1x128xf32, #tpu.memory_space<vmem>>, vector<1x1x128xf32>
      %71 = vector.shape_cast %70 : vector<1x1x128xf32> to vector<1x128xf32>
      %cst_41 = arith.constant dense<0.000000e+00> : vector<128xf32>
      %72 = vector.multi_reduction <add>, %59, %cst_41 [0] : vector<2x128xf32> to vector<128xf32>
      %73 = vector.shape_cast %72 : vector<128xf32> to vector<1x128xf32>
      %74 = arith.addf %71, %73 : vector<1x128xf32>
      %c1_42 = arith.constant 1 : index
      %c0_43 = arith.constant 0 : index
      %c0_44 = arith.constant 0 : index
      %75 = vector.load %arg7[%c1_42, %c0_43, %c0_44] : memref<3x1x128xf32, #tpu.memory_space<vmem>>, vector<1x1x128xf32>
      %76 = vector.shape_cast %75 : vector<1x1x128xf32> to vector<1x128xf32>
      %77 = vector.shape_cast %74 : vector<1x128xf32> to vector<1x1x128xf32>
      tpu.vector_store %arg7[%c1_42, %c0_43, %c0_44], %77 {strides = array<i32>} : memref<3x1x128xf32, #tpu.memory_space<vmem>>, vector<1x1x128xf32>,
      %78 = arith.mulf %28, %32 : vector<2x128xf32>
      %cst_45 = arith.constant 2.000000e+00 : f32
      %79 = vector.broadcast %cst_45 : f32 to vector<2x128xf32>
      %80 = arith.subf %34, %79 : vector<2x128xf32>
      %81 = arith.mulf %80, %80 : vector<2x128xf32>
      %82 = arith.mulf %81, %78 : vector<2x128xf32>
      %83 = arith.addf %61, %82 : vector<2x128xf32>
      %c2_46 = arith.constant 2 : index
      %c0_47 = arith.constant 0 : index
      %c0_48 = arith.constant 0 : index
      %84 = vector.load %arg6[%c2_46, %c0_47, %c0_48] : memref<3x1x128xf32, #tpu.memory_space<vmem>>, vector<1x1x128xf32>
      %85 = vector.shape_cast %84 : vector<1x1x128xf32> to vector<1x128xf32>
      %cst_49 = arith.constant dense<0.000000e+00> : vector<128xf32>
      %86 = vector.multi_reduction <add>, %78, %cst_49 [0] : vector<2x128xf32> to vector<128xf32>
      %87 = vector.shape_cast %86 : vector<128xf32> to vector<1x128xf32>
      %88 = arith.addf %85, %87 : vector<1x128xf32>
      %c2_50 = arith.constant 2 : index
      %c0_51 = arith.constant 0 : index
      %c0_52 = arith.constant 0 : index
      %89 = vector.load %arg6[%c2_50, %c0_51, %c0_52] : memref<3x1x128xf32, #tpu.memory_space<vmem>>, vector<1x1x128xf32>
      %90 = vector.shape_cast %89 : vector<1x1x128xf32> to vector<1x128xf32>
      %91 = vector.shape_cast %88 : vector<1x128xf32> to vector<1x1x128xf32>
      tpu.vector_store %arg6[%c2_50, %c0_51, %c0_52], %91 {strides = array<i32>} : memref<3x1x128xf32, #tpu.memory_space<vmem>>, vector<1x1x128xf32>,
      %c2_53 = arith.constant 2 : index
      %c0_54 = arith.constant 0 : index
      %c0_55 = arith.constant 0 : index
      %92 = vector.load %arg7[%c2_53, %c0_54, %c0_55] : memref<3x1x128xf32, #tpu.memory_space<vmem>>, vector<1x1x128xf32>
      %93 = vector.shape_cast %92 : vector<1x1x128xf32> to vector<1x128xf32>
      %cst_56 = arith.constant dense<0.000000e+00> : vector<128xf32>
      %94 = vector.multi_reduction <add>, %81, %cst_56 [0] : vector<2x128xf32> to vector<128xf32>
      %95 = vector.shape_cast %94 : vector<128xf32> to vector<1x128xf32>
      %96 = arith.addf %93, %95 : vector<1x128xf32>
      %c2_57 = arith.constant 2 : index
      %c0_58 = arith.constant 0 : index
      %c0_59 = arith.constant 0 : index
      %97 = vector.load %arg7[%c2_57, %c0_58, %c0_59] : memref<3x1x128xf32, #tpu.memory_space<vmem>>, vector<1x1x128xf32>
      %98 = vector.shape_cast %97 : vector<1x1x128xf32> to vector<1x128xf32>
      %99 = vector.shape_cast %96 : vector<1x128xf32> to vector<1x1x128xf32>
      tpu.vector_store %arg7[%c2_57, %c0_58, %c0_59], %99 {strides = array<i32>} : memref<3x1x128xf32, #tpu.memory_space<vmem>>, vector<1x1x128xf32>,
      %c0_60 = arith.constant 0 : index
      %c0_61 = arith.constant 0 : index
      %100 = vector.load %arg5[%c0_60, %c0_61] : memref<1x128xf32, #tpu.memory_space<vmem>>, vector<1x128xf32>
      %cst_62 = arith.constant dense<0.000000e+00> : vector<128xf32>
      %101 = vector.multi_reduction <add>, %83, %cst_62 [0] : vector<2x128xf32> to vector<128xf32>
      %102 = vector.shape_cast %101 : vector<128xf32> to vector<1x128xf32>
      %103 = arith.addf %100, %102 : vector<1x128xf32>
      %c0_63 = arith.constant 0 : index
      %c0_64 = arith.constant 0 : index
      %104 = vector.load %arg5[%c0_63, %c0_64] : memref<1x128xf32, #tpu.memory_space<vmem>>, vector<1x128xf32>
      tpu.vector_store %arg5[%c0_63, %c0_64], %103 {strides = array<i32>} : memref<1x128xf32, #tpu.memory_space<vmem>>, vector<1x128xf32>,
    } else {
    }
    %true = arith.constant true
    %9 = arith.xori %6, %true : i1
    %10 = arith.extui %9 : i1 to i32
    %c0_i32_3 = arith.constant 0 : i32
    %11 = arith.cmpi ne, %10, %c0_i32_3 : i32
    scf.if %11 {
      %15 = tpu.iota {dimensions = array<i32: 0>} : vector<2x128xi32>
      %16 = tpu.iota {dimensions = array<i32: 1>} : vector<2x128xi32>
      %c128_i32 = arith.constant 128 : i32
      %17 = vector.broadcast %c128_i32 : i32 to vector<2x128xi32>
      %18 = arith.muli %15, %17 : vector<2x128xi32>
      %19 = vector.broadcast %4 : i32 to vector<2x128xi32>
      %20 = arith.addi %19, %18 : vector<2x128xi32>
      %21 = arith.addi %20, %16 : vector<2x128xi32>
      %22 = vector.broadcast %3 : i32 to vector<2x128xi32>
      %23 = arith.cmpi slt, %21, %22 : vector<2x128xi32>
      %c0_6 = arith.constant 0 : index
      %c0_7 = arith.constant 0 : index
      %c0_8 = arith.constant 0 : index
      %24 = vector.load %arg2[%c0_6, %c0_7, %c0_8] : memref<3x2x128xf32, #tpu.memory_space<vmem>>, vector<1x2x128xf32>
      %25 = vector.shape_cast %24 : vector<1x2x128xf32> to vector<2x128xf32>
      %c1 = arith.constant 1 : index
      %c0_9 = arith.constant 0 : index
      %c0_10 = arith.constant 0 : index
      %26 = vector.load %arg2[%c1, %c0_9, %c0_10] : memref<3x2x128xf32, #tpu.memory_space<vmem>>, vector<1x2x128xf32>
      %27 = vector.shape_cast %26 : vector<1x2x128xf32> to vector<2x128xf32>
      %c2 = arith.constant 2 : index
      %c0_11 = arith.constant 0 : index
      %c0_12 = arith.constant 0 : index
      %28 = vector.load %arg2[%c2, %c0_11, %c0_12] : memref<3x2x128xf32, #tpu.memory_space<vmem>>, vector<1x2x128xf32>
      %29 = vector.shape_cast %28 : vector<1x2x128xf32> to vector<2x128xf32>
      %cst = arith.constant 0.000000e+00 : f32
      %30 = vector.broadcast %cst : f32 to vector<2x128xf32>
      %31 = arith.select %23, %25, %30 : vector<2x128xi1>, vector<2x128xf32>
      %cst_13 = arith.constant 0.000000e+00 : f32
      %32 = vector.broadcast %cst_13 : f32 to vector<2x128xf32>
      %33 = arith.select %23, %27, %32 : vector<2x128xi1>, vector<2x128xf32>
      %cst_14 = arith.constant 0.000000e+00 : f32
      %34 = vector.broadcast %cst_14 : f32 to vector<2x128xf32>
      %35 = arith.select %23, %29, %34 : vector<2x128xi1>, vector<2x128xf32>
      %36 = arith.maximumf %31, %33 : vector<2x128xf32>
      %37 = arith.maximumf %36, %35 : vector<2x128xf32>
      %38 = arith.subf %31, %37 : vector<2x128xf32>
      %39 = math.exp %38 : vector<2x128xf32>
      %40 = arith.subf %33, %37 : vector<2x128xf32>
      %41 = math.exp %40 : vector<2x128xf32>
      %42 = arith.subf %35, %37 : vector<2x128xf32>
      %43 = math.exp %42 : vector<2x128xf32>
      %44 = arith.addf %39, %41 : vector<2x128xf32>
      %45 = arith.addf %44, %43 : vector<2x128xf32>
      %cst_15 = arith.constant 1.000000e+00 : f32
      %46 = vector.broadcast %cst_15 : f32 to vector<2x128xf32>
      %47 = arith.divf %46, %45 : vector<2x128xf32>
      %c0_16 = arith.constant 0 : index
      %c0_17 = arith.constant 0 : index
      %48 = vector.load %arg3[%c0_16, %c0_17] : memref<2x128xi32, #tpu.memory_space<vmem>>, vector<2x128xi32>
      %49 = arith.sitofp %48 : vector<2x128xi32> to vector<2x128xf32>
      %50 = arith.mulf %39, %47 : vector<2x128xf32>
      %cst_18 = arith.constant 0.000000e+00 : f32
      %51 = vector.broadcast %cst_18 : f32 to vector<2x128xf32>
      %52 = arith.subf %49, %51 : vector<2x128xf32>
      %53 = arith.mulf %52, %52 : vector<2x128xf32>
      %cst_19 = arith.constant 0.000000e+00 : f32
      %54 = vector.broadcast %cst_19 : f32 to vector<2x128xf32>
      %55 = arith.select %23, %50, %54 : vector<2x128xi1>, vector<2x128xf32>
      %cst_20 = arith.constant 0.000000e+00 : f32
      %56 = vector.broadcast %cst_20 : f32 to vector<2x128xf32>
      %57 = arith.select %23, %53, %56 : vector<2x128xi1>, vector<2x128xf32>
      %58 = arith.mulf %57, %55 : vector<2x128xf32>
      %c0_21 = arith.constant 0 : index
      %c0_22 = arith.constant 0 : index
      %c0_23 = arith.constant 0 : index
      %59 = vector.load %arg6[%c0_21, %c0_22, %c0_23] : memref<3x1x128xf32, #tpu.memory_space<vmem>>, vector<1x1x128xf32>
      %60 = vector.shape_cast %59 : vector<1x1x128xf32> to vector<1x128xf32>
      %cst_24 = arith.constant dense<0.000000e+00> : vector<128xf32>
      %61 = vector.multi_reduction <add>, %55, %cst_24 [0] : vector<2x128xf32> to vector<128xf32>
      %62 = vector.shape_cast %61 : vector<128xf32> to vector<1x128xf32>
      %63 = arith.addf %60, %62 : vector<1x128xf32>
      %c0_25 = arith.constant 0 : index
      %c0_26 = arith.constant 0 : index
      %c0_27 = arith.constant 0 : index
      %64 = vector.load %arg6[%c0_25, %c0_26, %c0_27] : memref<3x1x128xf32, #tpu.memory_space<vmem>>, vector<1x1x128xf32>
      %65 = vector.shape_cast %64 : vector<1x1x128xf32> to vector<1x128xf32>
      %66 = vector.shape_cast %63 : vector<1x128xf32> to vector<1x1x128xf32>
      tpu.vector_store %arg6[%c0_25, %c0_26, %c0_27], %66 {strides = array<i32>} : memref<3x1x128xf32, #tpu.memory_space<vmem>>, vector<1x1x128xf32>,
      %c0_28 = arith.constant 0 : index
      %c0_29 = arith.constant 0 : index
      %c0_30 = arith.constant 0 : index
      %67 = vector.load %arg7[%c0_28, %c0_29, %c0_30] : memref<3x1x128xf32, #tpu.memory_space<vmem>>, vector<1x1x128xf32>
      %68 = vector.shape_cast %67 : vector<1x1x128xf32> to vector<1x128xf32>
      %cst_31 = arith.constant dense<0.000000e+00> : vector<128xf32>
      %69 = vector.multi_reduction <add>, %57, %cst_31 [0] : vector<2x128xf32> to vector<128xf32>
      %70 = vector.shape_cast %69 : vector<128xf32> to vector<1x128xf32>
      %71 = arith.addf %68, %70 : vector<1x128xf32>
      %c0_32 = arith.constant 0 : index
      %c0_33 = arith.constant 0 : index
      %c0_34 = arith.constant 0 : index
      %72 = vector.load %arg7[%c0_32, %c0_33, %c0_34] : memref<3x1x128xf32, #tpu.memory_space<vmem>>, vector<1x1x128xf32>
      %73 = vector.shape_cast %72 : vector<1x1x128xf32> to vector<1x128xf32>
      %74 = vector.shape_cast %71 : vector<1x128xf32> to vector<1x1x128xf32>
      tpu.vector_store %arg7[%c0_32, %c0_33, %c0_34], %74 {strides = array<i32>} : memref<3x1x128xf32, #tpu.memory_space<vmem>>, vector<1x1x128xf32>,
      %75 = arith.mulf %41, %47 : vector<2x128xf32>
      %cst_35 = arith.constant 1.000000e+00 : f32
      %76 = vector.broadcast %cst_35 : f32 to vector<2x128xf32>
      %77 = arith.subf %49, %76 : vector<2x128xf32>
      %78 = arith.mulf %77, %77 : vector<2x128xf32>
      %cst_36 = arith.constant 0.000000e+00 : f32
      %79 = vector.broadcast %cst_36 : f32 to vector<2x128xf32>
      %80 = arith.select %23, %75, %79 : vector<2x128xi1>, vector<2x128xf32>
      %cst_37 = arith.constant 0.000000e+00 : f32
      %81 = vector.broadcast %cst_37 : f32 to vector<2x128xf32>
      %82 = arith.select %23, %78, %81 : vector<2x128xi1>, vector<2x128xf32>
      %83 = arith.mulf %82, %80 : vector<2x128xf32>
      %84 = arith.addf %58, %83 : vector<2x128xf32>
      %c1_38 = arith.constant 1 : index
      %c0_39 = arith.constant 0 : index
      %c0_40 = arith.constant 0 : index
      %85 = vector.load %arg6[%c1_38, %c0_39, %c0_40] : memref<3x1x128xf32, #tpu.memory_space<vmem>>, vector<1x1x128xf32>
      %86 = vector.shape_cast %85 : vector<1x1x128xf32> to vector<1x128xf32>
      %cst_41 = arith.constant dense<0.000000e+00> : vector<128xf32>
      %87 = vector.multi_reduction <add>, %80, %cst_41 [0] : vector<2x128xf32> to vector<128xf32>
      %88 = vector.shape_cast %87 : vector<128xf32> to vector<1x128xf32>
      %89 = arith.addf %86, %88 : vector<1x128xf32>
      %c1_42 = arith.constant 1 : index
      %c0_43 = arith.constant 0 : index
      %c0_44 = arith.constant 0 : index
      %90 = vector.load %arg6[%c1_42, %c0_43, %c0_44] : memref<3x1x128xf32, #tpu.memory_space<vmem>>, vector<1x1x128xf32>
      %91 = vector.shape_cast %90 : vector<1x1x128xf32> to vector<1x128xf32>
      %92 = vector.shape_cast %89 : vector<1x128xf32> to vector<1x1x128xf32>
      tpu.vector_store %arg6[%c1_42, %c0_43, %c0_44], %92 {strides = array<i32>} : memref<3x1x128xf32, #tpu.memory_space<vmem>>, vector<1x1x128xf32>,
      %c1_45 = arith.constant 1 : index
      %c0_46 = arith.constant 0 : index
      %c0_47 = arith.constant 0 : index
      %93 = vector.load %arg7[%c1_45, %c0_46, %c0_47] : memref<3x1x128xf32, #tpu.memory_space<vmem>>, vector<1x1x128xf32>
      %94 = vector.shape_cast %93 : vector<1x1x128xf32> to vector<1x128xf32>
      %cst_48 = arith.constant dense<0.000000e+00> : vector<128xf32>
      %95 = vector.multi_reduction <add>, %82, %cst_48 [0] : vector<2x128xf32> to vector<128xf32>
      %96 = vector.shape_cast %95 : vector<128xf32> to vector<1x128xf32>
      %97 = arith.addf %94, %96 : vector<1x128xf32>
      %c1_49 = arith.constant 1 : index
      %c0_50 = arith.constant 0 : index
      %c0_51 = arith.constant 0 : index
      %98 = vector.load %arg7[%c1_49, %c0_50, %c0_51] : memref<3x1x128xf32, #tpu.memory_space<vmem>>, vector<1x1x128xf32>
      %99 = vector.shape_cast %98 : vector<1x1x128xf32> to vector<1x128xf32>
      %100 = vector.shape_cast %97 : vector<1x128xf32> to vector<1x1x128xf32>
      tpu.vector_store %arg7[%c1_49, %c0_50, %c0_51], %100 {strides = array<i32>} : memref<3x1x128xf32, #tpu.memory_space<vmem>>, vector<1x1x128xf32>,
      %101 = arith.mulf %43, %47 : vector<2x128xf32>
      %cst_52 = arith.constant 2.000000e+00 : f32
      %102 = vector.broadcast %cst_52 : f32 to vector<2x128xf32>
      %103 = arith.subf %49, %102 : vector<2x128xf32>
      %104 = arith.mulf %103, %103 : vector<2x128xf32>
      %cst_53 = arith.constant 0.000000e+00 : f32
      %105 = vector.broadcast %cst_53 : f32 to vector<2x128xf32>
      %106 = arith.select %23, %101, %105 : vector<2x128xi1>, vector<2x128xf32>
      %cst_54 = arith.constant 0.000000e+00 : f32
      %107 = vector.broadcast %cst_54 : f32 to vector<2x128xf32>
      %108 = arith.select %23, %104, %107 : vector<2x128xi1>, vector<2x128xf32>
      %109 = arith.mulf %108, %106 : vector<2x128xf32>
      %110 = arith.addf %84, %109 : vector<2x128xf32>
      %c2_55 = arith.constant 2 : index
      %c0_56 = arith.constant 0 : index
      %c0_57 = arith.constant 0 : index
      %111 = vector.load %arg6[%c2_55, %c0_56, %c0_57] : memref<3x1x128xf32, #tpu.memory_space<vmem>>, vector<1x1x128xf32>
      %112 = vector.shape_cast %111 : vector<1x1x128xf32> to vector<1x128xf32>
      %cst_58 = arith.constant dense<0.000000e+00> : vector<128xf32>
      %113 = vector.multi_reduction <add>, %106, %cst_58 [0] : vector<2x128xf32> to vector<128xf32>
      %114 = vector.shape_cast %113 : vector<128xf32> to vector<1x128xf32>
      %115 = arith.addf %112, %114 : vector<1x128xf32>
      %c2_59 = arith.constant 2 : index
      %c0_60 = arith.constant 0 : index
      %c0_61 = arith.constant 0 : index
      %116 = vector.load %arg6[%c2_59, %c0_60, %c0_61] : memref<3x1x128xf32, #tpu.memory_space<vmem>>, vector<1x1x128xf32>
      %117 = vector.shape_cast %116 : vector<1x1x128xf32> to vector<1x128xf32>
      %118 = vector.shape_cast %115 : vector<1x128xf32> to vector<1x1x128xf32>
      tpu.vector_store %arg6[%c2_59, %c0_60, %c0_61], %118 {strides = array<i32>} : memref<3x1x128xf32, #tpu.memory_space<vmem>>, vector<1x1x128xf32>,
      %c2_62 = arith.constant 2 : index
      %c0_63 = arith.constant 0 : index
      %c0_64 = arith.constant 0 : index
      %119 = vector.load %arg7[%c2_62, %c0_63, %c0_64] : memref<3x1x128xf32, #tpu.memory_space<vmem>>, vector<1x1x128xf32>
      %120 = vector.shape_cast %119 : vector<1x1x128xf32> to vector<1x128xf32>
      %cst_65 = arith.constant dense<0.000000e+00> : vector<128xf32>
      %121 = vector.multi_reduction <add>, %108, %cst_65 [0] : vector<2x128xf32> to vector<128xf32>
      %122 = vector.shape_cast %121 : vector<128xf32> to vector<1x128xf32>
      %123 = arith.addf %120, %122 : vector<1x128xf32>
      %c2_66 = arith.constant 2 : index
      %c0_67 = arith.constant 0 : index
      %c0_68 = arith.constant 0 : index
      %124 = vector.load %arg7[%c2_66, %c0_67, %c0_68] : memref<3x1x128xf32, #tpu.memory_space<vmem>>, vector<1x1x128xf32>
      %125 = vector.shape_cast %124 : vector<1x1x128xf32> to vector<1x128xf32>
      %126 = vector.shape_cast %123 : vector<1x128xf32> to vector<1x1x128xf32>
      tpu.vector_store %arg7[%c2_66, %c0_67, %c0_68], %126 {strides = array<i32>} : memref<3x1x128xf32, #tpu.memory_space<vmem>>, vector<1x1x128xf32>,
      %c0_69 = arith.constant 0 : index
      %c0_70 = arith.constant 0 : index
      %127 = vector.load %arg5[%c0_69, %c0_70] : memref<1x128xf32, #tpu.memory_space<vmem>>, vector<1x128xf32>
      %cst_71 = arith.constant dense<0.000000e+00> : vector<128xf32>
      %128 = vector.multi_reduction <add>, %110, %cst_71 [0] : vector<2x128xf32> to vector<128xf32>
      %129 = vector.shape_cast %128 : vector<128xf32> to vector<1x128xf32>
      %130 = arith.addf %127, %129 : vector<1x128xf32>
      %c0_72 = arith.constant 0 : index
      %c0_73 = arith.constant 0 : index
      %131 = vector.load %arg5[%c0_72, %c0_73] : memref<1x128xf32, #tpu.memory_space<vmem>>, vector<1x128xf32>
      tpu.vector_store %arg5[%c0_72, %c0_73], %130 {strides = array<i32>} : memref<1x128xf32, #tpu.memory_space<vmem>>, vector<1x128xf32>,
    } else {
    }
    %c0_i32_4 = arith.constant 0 : i32
    %12 = arith.cmpi eq, %arg0, %c0_i32_4 : i32
    %13 = arith.extui %12 : i1 to i32
    %c0_i32_5 = arith.constant 0 : i32
    %14 = arith.cmpi ne, %13, %c0_i32_5 : i32
    scf.if %14 {
      %c0_6 = arith.constant 0 : index
      %c0_7 = arith.constant 0 : index
      %15 = vector.load %arg5[%c0_6, %c0_7] : memref<1x128xf32, #tpu.memory_space<vmem>>, vector<1x128xf32>
      %cst = arith.constant dense<0.000000e+00> : vector<1xf32>
      %16 = vector.multi_reduction <add>, %15, %cst [1] : vector<1x128xf32> to vector<1xf32>
      %17 = vector.shape_cast %16 : vector<1xf32> to vector<1x1xf32>
      %cst_8 = arith.constant dense<0.000000e+00> : vector<1xf32>
      %18 = vector.multi_reduction <add>, %17, %cst_8 [0] : vector<1x1xf32> to vector<1xf32>
      %19 = vector.shape_cast %18 : vector<1xf32> to vector<1x1xf32>
      %cst_9 = arith.constant 0.000000e+00 : f32
      %20 = vector.broadcast %cst_9 : f32 to vector<1x1xf32>
      %cst_10 = arith.constant 0.000000e+00 : f32
      %21 = vector.broadcast %cst_10 : f32 to vector<1x1xf32>
      %c0_11 = arith.constant 0 : index
      %c0_12 = arith.constant 0 : index
      %c0_13 = arith.constant 0 : index
      %22 = vector.load %arg6[%c0_11, %c0_12, %c0_13] : memref<3x1x128xf32, #tpu.memory_space<vmem>>, vector<1x1x128xf32>
      %23 = vector.shape_cast %22 : vector<1x1x128xf32> to vector<1x128xf32>
      %cst_14 = arith.constant dense<0.000000e+00> : vector<1xf32>
      %24 = vector.multi_reduction <add>, %23, %cst_14 [1] : vector<1x128xf32> to vector<1xf32>
      %25 = vector.shape_cast %24 : vector<1xf32> to vector<1x1xf32>
      %cst_15 = arith.constant dense<0.000000e+00> : vector<1xf32>
      %26 = vector.multi_reduction <add>, %25, %cst_15 [0] : vector<1x1xf32> to vector<1xf32>
      %27 = vector.shape_cast %26 : vector<1xf32> to vector<1x1xf32>
      %c0_16 = arith.constant 0 : index
      %c0_17 = arith.constant 0 : index
      %c0_18 = arith.constant 0 : index
      %28 = vector.load %arg7[%c0_16, %c0_17, %c0_18] : memref<3x1x128xf32, #tpu.memory_space<vmem>>, vector<1x1x128xf32>
      %29 = vector.shape_cast %28 : vector<1x1x128xf32> to vector<1x128xf32>
      %cst_19 = arith.constant dense<0.000000e+00> : vector<1xf32>
      %30 = vector.multi_reduction <add>, %29, %cst_19 [1] : vector<1x128xf32> to vector<1xf32>
      %31 = vector.shape_cast %30 : vector<1xf32> to vector<1x1xf32>
      %cst_20 = arith.constant dense<0.000000e+00> : vector<1xf32>
      %32 = vector.multi_reduction <add>, %31, %cst_20 [0] : vector<1x1xf32> to vector<1xf32>
      %33 = vector.shape_cast %32 : vector<1xf32> to vector<1x1xf32>
      %34 = arith.addf %20, %27 : vector<1x1xf32>
      %35 = arith.mulf %27, %33 : vector<1x1xf32>
      %36 = arith.addf %21, %35 : vector<1x1xf32>
      %c1 = arith.constant 1 : index
      %c0_21 = arith.constant 0 : index
      %c0_22 = arith.constant 0 : index
      %37 = vector.load %arg6[%c1, %c0_21, %c0_22] : memref<3x1x128xf32, #tpu.memory_space<vmem>>, vector<1x1x128xf32>
      %38 = vector.shape_cast %37 : vector<1x1x128xf32> to vector<1x128xf32>
      %cst_23 = arith.constant dense<0.000000e+00> : vector<1xf32>
      %39 = vector.multi_reduction <add>, %38, %cst_23 [1] : vector<1x128xf32> to vector<1xf32>
      %40 = vector.shape_cast %39 : vector<1xf32> to vector<1x1xf32>
      %cst_24 = arith.constant dense<0.000000e+00> : vector<1xf32>
      %41 = vector.multi_reduction <add>, %40, %cst_24 [0] : vector<1x1xf32> to vector<1xf32>
      %42 = vector.shape_cast %41 : vector<1xf32> to vector<1x1xf32>
      %c1_25 = arith.constant 1 : index
      %c0_26 = arith.constant 0 : index
      %c0_27 = arith.constant 0 : index
      %43 = vector.load %arg7[%c1_25, %c0_26, %c0_27] : memref<3x1x128xf32, #tpu.memory_space<vmem>>, vector<1x1x128xf32>
      %44 = vector.shape_cast %43 : vector<1x1x128xf32> to vector<1x128xf32>
      %cst_28 = arith.constant dense<0.000000e+00> : vector<1xf32>
      %45 = vector.multi_reduction <add>, %44, %cst_28 [1] : vector<1x128xf32> to vector<1xf32>
      %46 = vector.shape_cast %45 : vector<1xf32> to vector<1x1xf32>
      %cst_29 = arith.constant dense<0.000000e+00> : vector<1xf32>
      %47 = vector.multi_reduction <add>, %46, %cst_29 [0] : vector<1x1xf32> to vector<1xf32>
      %48 = vector.shape_cast %47 : vector<1xf32> to vector<1x1xf32>
      %49 = arith.addf %34, %42 : vector<1x1xf32>
      %50 = arith.mulf %42, %48 : vector<1x1xf32>
      %51 = arith.addf %36, %50 : vector<1x1xf32>
      %c2 = arith.constant 2 : index
      %c0_30 = arith.constant 0 : index
      %c0_31 = arith.constant 0 : index
      %52 = vector.load %arg6[%c2, %c0_30, %c0_31] : memref<3x1x128xf32, #tpu.memory_space<vmem>>, vector<1x1x128xf32>
      %53 = vector.shape_cast %52 : vector<1x1x128xf32> to vector<1x128xf32>
      %cst_32 = arith.constant dense<0.000000e+00> : vector<1xf32>
      %54 = vector.multi_reduction <add>, %53, %cst_32 [1] : vector<1x128xf32> to vector<1xf32>
      %55 = vector.shape_cast %54 : vector<1xf32> to vector<1x1xf32>
      %cst_33 = arith.constant dense<0.000000e+00> : vector<1xf32>
      %56 = vector.multi_reduction <add>, %55, %cst_33 [0] : vector<1x1xf32> to vector<1xf32>
      %57 = vector.shape_cast %56 : vector<1xf32> to vector<1x1xf32>
      %c2_34 = arith.constant 2 : index
      %c0_35 = arith.constant 0 : index
      %c0_36 = arith.constant 0 : index
      %58 = vector.load %arg7[%c2_34, %c0_35, %c0_36] : memref<3x1x128xf32, #tpu.memory_space<vmem>>, vector<1x1x128xf32>
      %59 = vector.shape_cast %58 : vector<1x1x128xf32> to vector<1x128xf32>
      %cst_37 = arith.constant dense<0.000000e+00> : vector<1xf32>
      %60 = vector.multi_reduction <add>, %59, %cst_37 [1] : vector<1x128xf32> to vector<1xf32>
      %61 = vector.shape_cast %60 : vector<1xf32> to vector<1x1xf32>
      %cst_38 = arith.constant dense<0.000000e+00> : vector<1xf32>
      %62 = vector.multi_reduction <add>, %61, %cst_38 [0] : vector<1x1xf32> to vector<1xf32>
      %63 = vector.shape_cast %62 : vector<1xf32> to vector<1x1xf32>
      %64 = arith.addf %49, %57 : vector<1x1xf32>
      %65 = arith.mulf %57, %63 : vector<1x1xf32>
      %66 = arith.addf %51, %65 : vector<1x1xf32>
      %67 = arith.divf %66, %64 : vector<1x1xf32>
      %cst_39 = arith.constant 1.000000e-07 : f32
      %68 = vector.broadcast %cst_39 : f32 to vector<1x1xf32>
      %69 = arith.addf %67, %68 : vector<1x1xf32>
      %70 = arith.divf %19, %69 : vector<1x1xf32>
      %c0_40 = arith.constant 0 : index
      %c0_41 = arith.constant 0 : index
      %71 = vector.load %arg4[%c0_40, %c0_41] : memref<1x1xf32, #tpu.memory_space<vmem>>, vector<1x1xf32>
      tpu.vector_store %arg4[%c0_40, %c0_41], %70 {strides = array<i32>} : memref<1x1xf32, #tpu.memory_space<vmem>>, vector<1x1xf32>,
    } else {
    }
    return
  }
  func.func @transform_0(%arg0: i32, %arg1: memref<1xi32, #tpu.memory_space<smem>>) -> (i32, i32, i32) {
    %c0_i32 = arith.constant 0 : i32
    %c0_i32_0 = arith.constant 0 : i32
    %c0_i32_1 = arith.constant 0 : i32
    return %c0_i32, %arg0, %c0_i32_0 : i32, i32, i32
  }
  func.func @transform_1(%arg0: i32, %arg1: memref<1xi32, #tpu.memory_space<smem>>) -> (i32, i32) {
    %c0_i32 = arith.constant 0 : i32
    %c0_i32_0 = arith.constant 0 : i32
    return %arg0, %c0_i32 : i32, i32
  }
  func.func @transform_2(%arg0: i32, %arg1: memref<1xi32, #tpu.memory_space<smem>>) -> (i32, i32) {
    %c0_i32 = arith.constant 0 : i32
    %c0_i32_0 = arith.constant 0 : i32
    %c0_i32_1 = arith.constant 0 : i32
    return %c0_i32, %c0_i32_0 : i32, i32
  }
}

</mosaic_0001>

<llo_original>
// kernel: tpu_custom_call.1
$region0: #{tpu_custom_call.1}
  #allocation0 [shape = 'u32[]', space=smem, size = 0x4, offset = 0x4, fixed_abs, tag = 'smem constant byte address 0x4 - core index']
  #allocation1 [shape = 'u32[72,128]{1,0:T(1,128)}', space=vmem, size = 0x9000, scoped, tag = 'internal scratch']
  #allocation2 [shape = 'f32[1,128]{1,0:T(1,128)}', space=vmem, size = 0x200, scoped, tag = 'scratch operand']
  #allocation3 [shape = 'f32[3,1,128]{2,1,0:T(1,128)}', space=vmem, size = 0x600, scoped, tag = 'scratch operand']
  #allocation4 [shape = 'f32[3,1,128]{2,1,0:T(1,128)}', space=vmem, size = 0x600, scoped, tag = 'scratch operand']
  #allocation5 [shape = 's32[1]{0}', space=sflag, size = 0x4, scoped, tag = 'scoped memory for tpu_custom_call.1']
  #allocation6 [shape = 's32[1]{0:T(128)S(6)}', space=smem, size = 0x200, scoped, tag = 'prefetched SMEM operand 0']
  %s0 = inlined_call_operand.<no memory space> [shape: s32[1], index: 0, kind: input, shape index: {}]
  %s1 = inlined_call_operand.hbm [shape: f32[3,2,128], index: 1, kind: input, shape index: {}]
  %s2 = inlined_call_operand.vmem [shape: s32[2,128], index: 2, kind: input, shape index: {}]
  %s3 = inlined_call_operand.hbm [shape: f32[1,1], index: 3, kind: output, shape index: {}]
  %s4 = sld [smem:[#allocation0]]
  $region38: #{tpu_custom_call.1} parent=0
    _
  %s6 = ssub.s32 1, %s4
  %s7 = scalar_select 0, %s6, %s4
  %8 = sst [smem:[#allocation6]] %s0
  $region1: #{tpu_custom_call.1} parent=0
    #allocation7 [shape = 'u8[3072]{0}', space=vmem, size = 0xc00, scoped, tag = 'input window, operand 1, single buffered']
    #allocation8 [shape = 's32[1]{0}', space=sflag, size = 0x4, scoped, tag = 'scoped memory for tpu_custom_call.1']
    #allocation9 [shape = 's32[1]{0}', space=sflag, size = 0x4, scoped, tag = 'scoped memory for tpu_custom_call.1']
    #allocation10 [shape = 'u8[512]{0}', space=vmem, size = 0x400, scoped, tag = 'output window, operand 0, single buffered']
    %9 = vsyncpa [#allocation8], 0
    %10 = vsyncpa [#allocation9], 0
    // Predicated region
    $region2: #{tpu_custom_call.1} parent=1 // pred_check
      _
    $region3: #{tpu_custom_call.1} parent=1 // pred_check_branch
      %12 = sbr.rel (0) target = $region5
    $region4: #{tpu_custom_call.1} parent=1 // pred_region
      %14 = vsyncadd [#allocation8], 0
      %s15 = sshll.u32 %s1, 4
      %s16 = int_to_ptr.hbm [resolvable:$true] %s15
      %s17 = sshll.u32 [#allocation7], 4
      %s18 = int_to_ptr.vmem [resolvable:$true] %s17
      %23 = dma.hbm_to_vmem [thread:$0]  %s16, 96, %s18, [#allocation8], 32, 32, 2
    $region5: #{tpu_custom_call.1} parent=1 // pred_fallthru
      _
    // Predicated region
    $region6: #{tpu_custom_call.1} parent=1 // pred_check
      _
    $region7: #{tpu_custom_call.1} parent=1 // pred_check_branch
      %25 = sbr.rel (0) target = $region9
    $region8: #{tpu_custom_call.1} parent=1 // pred_region
      _
    $region9: #{tpu_custom_call.1} parent=1 // pred_fallthru
      _
    // Predicated region
    $region10: #{tpu_custom_call.1} parent=1 // pred_check
      _
    $region11: #{tpu_custom_call.1} parent=1 // pred_check_branch
      %27 = sbr.rel (0) target = $region13
    $region12: #{tpu_custom_call.1} parent=1 // pred_region
      %29 = dma.done [#allocation8], 96
    $region13: #{tpu_custom_call.1} parent=1 // pred_fallthru
      _
    %p30 = scmp.eq.s32.totalorder 0, 0
    // Predicated region
    $region14: #{tpu_custom_call.1} parent=1 // pred_check
      %p31 = pneg %p30
    $region15: #{tpu_custom_call.1} parent=1 // pred_check_branch
      %33 = sbr.rel (%p31) target = $region17
    $region16: #{tpu_custom_call.1} parent=1 // pred_region
      %34 = vst [vmem:[#allocation2] sm:$0x1] 0.0
      %35 = vst [vmem:[#allocation3] sm:$0x1] 0.0
      %36 = vst [vmem:[#allocation3 + $0x1] sm:$0x1] 0.0
      %37 = vst [vmem:[#allocation3 + $0x2] sm:$0x1] 0.0
      %38 = vst [vmem:[#allocation4] sm:$0x1] 0.0
      %39 = vst [vmem:[#allocation4 + $0x1] sm:$0x1] 0.0
      %40 = vst [vmem:[#allocation4 + $0x2] sm:$0x1] 0.0
    $region17: #{tpu_custom_call.1} parent=1 // pred_fallthru
      _
    %s41 = sld [smem:[#allocation6]]
    %s42 = smul.u32 0, 256
    %s43 = sadd.s32 %s42, 256
    %p44 = scmp.le.s32.totalorder %s43, %s41
    // Predicated region
    $region18: #{tpu_custom_call.1} parent=1 // pred_check
      %p45 = pneg %p44
    $region19: #{tpu_custom_call.1} parent=1 // pred_check_branch
      %47 = sbr.rel (%p45) target = $region21
    $region20: #{tpu_custom_call.1} parent=1 // pred_region
      %v48 = vld [vmem:[#allocation7] sm:$0x3]
      %s49 = scalar_lea.vmem [#allocation7], 2
      %v50 = vld [vmem:[%s49] sm:$0x3]
      %s51 = scalar_lea.vmem [#allocation7], 4
      %v52 = vld [vmem:[%s51] sm:$0x3]
      %v53 = vmax.f32 %v48, %v50
      %v54 = vmax.f32 %v53, %v52
      %v55 = vsub.f32 %v48, %v54
      %v56 = vmul.f32 %v55, 1.442695
      %v57 = vpow.pop %v56
      %v58 = vsub.f32 %v50, %v54
      %v59 = vmul.f32 %v58, 1.442695
      %v60 = vpow.pop %v59
      %v61 = vsub.f32 %v52, %v54
      %v62 = vmul.f32 %v61, 1.442695
      %v63 = vpow.pop %v62
      %v64 = vadd.f32 %v57, %v60
      %v65 = vadd.f32 %v64, %v63
      %v66 = vrcp.pop %v65
      %v67 = vmul.f32 %v65, %v66
      %v68 = vsub.f32 1.0, %v67
      %v69 = vmul.f32 %v66, %v68
      %v70 = vadd.f32 %v66, %v69
      %vm71 = vweird.f32 %v65
      %vm72 = vweird.f32 %v66
      %vm73 = vmor %vm71, %vm72
      %v74 = vsel %vm73, %v66, %v70
      %v75 = vand.u32 2147483647, %v65
      %vm76 = vcmp.eq.f32.partialorder %v75, 8.507059e+37
      %v77 = vand.u32 %v65, 2147483648
      %v78 = vor.u32 1.1754944e-38, %v77
      %v79 = vsel %vm76, %v78, %v74
      %v80 = vmul.f32 1.0, %v79
      %v81 = vld [vmem:[%s2] sm:$0x3]
      %v82 = vcvt.s32.f32 %v81
      %v83 = vmul.f32 %v57, %v80
      %v84 = vmul.f32 %v82, %v82
      %v85 = vmul.f32 %v84, %v83
      %v86 = vld [vmem:[#allocation3] sm:$0x1]
      %vm87 = vcmask 1041408
      %v88 = vsel %vm87, %v83, 0.0
      %v89 = vrot.slane %v88, 4
      %v90 = vadd.f32 %v88, %v89
      %v91 = vrot.slane %v90, 2
      %v92 = vadd.f32 %v90, %v91
      %v93 = vrot.slane %v92, 1
      %v94 = vadd.f32 %v92, %v93
      %v95 = vadd.f32 %v86, %v94
      %96 = vst [vmem:[#allocation3] sm:$0x1] %v95
      %v97 = vld [vmem:[#allocation4] sm:$0x1]
      %v98 = vsel %vm87, %v84, 0.0
      %v99 = vrot.slane %v98, 4
      %v100 = vadd.f32 %v98, %v99
      %v101 = vrot.slane %v100, 2
      %v102 = vadd.f32 %v100, %v101
      %v103 = vrot.slane %v102, 1
      %v104 = vadd.f32 %v102, %v103
      %v105 = vadd.f32 %v97, %v104
      %106 = vst [vmem:[#allocation4] sm:$0x1] %v105
      %v107 = vmul.f32 %v60, %v80
      %v108 = vsub.f32 %v82, 1.0
      %v109 = vmul.f32 %v108, %v108
      %v110 = vmul.f32 %v109, %v107
      %v111 = vadd.f32 %v85, %v110
      %s112 = scalar_lea.vmem [#allocation3], 1
      %v113 = vld [vmem:[%s112] sm:$0x1]
      %v114 = vsel %vm87, %v107, 0.0
      %v115 = vrot.slane %v114, 4
      %v116 = vadd.f32 %v114, %v115
      %v117 = vrot.slane %v116, 2
      %v118 = vadd.f32 %v116, %v117
      %v119 = vrot.slane %v118, 1
      %v120 = vadd.f32 %v118, %v119
      %v121 = vadd.f32 %v113, %v120
      %122 = vst [vmem:[%s112] sm:$0x1] %v121
      %s123 = scalar_lea.vmem [#allocation4], 1
      %v124 = vld [vmem:[%s123] sm:$0x1]
      %v125 = vsel %vm87, %v109, 0.0
      %v126 = vrot.slane %v125, 4
      %v127 = vadd.f32 %v125, %v126
      %v128 = vrot.slane %v127, 2
      %v129 = vadd.f32 %v127, %v128
      %v130 = vrot.slane %v129, 1
      %v131 = vadd.f32 %v129, %v130
      %v132 = vadd.f32 %v124, %v131
      %133 = vst [vmem:[%s123] sm:$0x1] %v132
      %v134 = vmul.f32 %v63, %v80
      %v135 = vsub.f32 %v82, 2.0
      %v136 = vmul.f32 %v135, %v135
      %v137 = vmul.f32 %v136, %v134
      %v138 = vadd.f32 %v111, %v137
      %s139 = scalar_lea.vmem [#allocation3], 2
      %v140 = vld [vmem:[%s139] sm:$0x1]
      %v141 = vsel %vm87, %v134, 0.0
      %v142 = vrot.slane %v141, 4
      %v143 = vadd.f32 %v141, %v142
      %v144 = vrot.slane %v143, 2
      %v145 = vadd.f32 %v143, %v144
      %v146 = vrot.slane %v145, 1
      %v147 = vadd.f32 %v145, %v146
      %v148 = vadd.f32 %v140, %v147
      %149 = vst [vmem:[%s139] sm:$0x1] %v148
      %s150 = scalar_lea.vmem [#allocation4], 2
      %v151 = vld [vmem:[%s150] sm:$0x1]
      %v152 = vsel %vm87, %v136, 0.0
      %v153 = vrot.slane %v152, 4
      %v154 = vadd.f32 %v152, %v153
      %v155 = vrot.slane %v154, 2
      %v156 = vadd.f32 %v154, %v155
      %v157 = vrot.slane %v156, 1
      %v158 = vadd.f32 %v156, %v157
      %v159 = vadd.f32 %v151, %v158
      %160 = vst [vmem:[%s150] sm:$0x1] %v159
      %v161 = vld [vmem:[#allocation2] sm:$0x1]
      %v162 = vsel %vm87, %v138, 0.0
      %v163 = vrot.slane %v162, 4
      %v164 = vadd.f32 %v162, %v163
      %v165 = vrot.slane %v164, 2
      %v166 = vadd.f32 %v164, %v165
      %v167 = vrot.slane %v166, 1
      %v168 = vadd.f32 %v166, %v167
      %v169 = vadd.f32 %v161, %v168
      %170 = vst [vmem:[#allocation2] sm:$0x1] %v169
    $region21: #{tpu_custom_call.1} parent=1 // pred_fallthru
      _
    %p171 = scmp.gt.s32.totalorder %s43, %s41
    // Predicated region
    $region22: #{tpu_custom_call.1} parent=1 // pred_check
      %p172 = pneg %p171
    $region23: #{tpu_custom_call.1} parent=1 // pred_check_branch
      %174 = sbr.rel (%p172) target = $region25
    $region24: #{tpu_custom_call.1} parent=1 // pred_region
      %v175 = vlaneseq
      %v176 = vshrl.u32 %v175, 7
      %v177 = vlaneseq
      %v178 = vand.u32 %v177, 127
      %v179 = vmul.u32 %v176, 128
      %v180 = vstv %s42
      %v181 = vadd.s32 %v180, %v179
      %v182 = vadd.s32 %v181, %v178
      %v183 = vstv %s41
      %vm184 = vcmp.lt.s32.totalorder %v182, %v183
      %v185 = vld [vmem:[#allocation7] sm:$0x3]
      %s186 = scalar_lea.vmem [#allocation7], 2
      %v187 = vld [vmem:[%s186] sm:$0x3]
      %s188 = scalar_lea.vmem [#allocation7], 4
      %v189 = vld [vmem:[%s188] sm:$0x3]
      %v190 = vsel %vm184, %v185, 0.0
      %v191 = vsel %vm184, %v187, 0.0
      %v192 = vsel %vm184, %v189, 0.0
      %v193 = vmax.f32 %v190, %v191
      %v194 = vmax.f32 %v193, %v192
      %v195 = vsub.f32 %v190, %v194
      %v196 = vmul.f32 %v195, 1.442695
      %v197 = vpow.pop %v196
      %v198 = vsub.f32 %v191, %v194
      %v199 = vmul.f32 %v198, 1.442695
      %v200 = vpow.pop %v199
      %v201 = vsub.f32 %v192, %v194
      %v202 = vmul.f32 %v201, 1.442695
      %v203 = vpow.pop %v202
      %v204 = vadd.f32 %v197, %v200
      %v205 = vadd.f32 %v204, %v203
      %v206 = vrcp.pop %v205
      %v207 = vmul.f32 %v205, %v206
      %v208 = vsub.f32 1.0, %v207
      %v209 = vmul.f32 %v206, %v208
      %v210 = vadd.f32 %v206, %v209
      %vm211 = vweird.f32 %v205
      %vm212 = vweird.f32 %v206
      %vm213 = vmor %vm211, %vm212
      %v214 = vsel %vm213, %v206, %v210
      %v215 = vand.u32 2147483647, %v205
      %vm216 = vcmp.eq.f32.partialorder %v215, 8.507059e+37
      %v217 = vand.u32 %v205, 2147483648
      %v218 = vor.u32 1.1754944e-38, %v217
      %v219 = vsel %vm216, %v218, %v214
      %v220 = vmul.f32 1.0, %v219
      %v221 = vld [vmem:[%s2] sm:$0x3]
      %v222 = vcvt.s32.f32 %v221
      %v223 = vmul.f32 %v197, %v220
      %v224 = vmul.f32 %v222, %v222
      %v225 = vsel %vm184, %v223, 0.0
      %v226 = vsel %vm184, %v224, 0.0
      %v227 = vmul.f32 %v226, %v225
      %v228 = vld [vmem:[#allocation3] sm:$0x1]
      %vm229 = vcmask 1041408
      %v230 = vsel %vm229, %v225, 0.0
      %v231 = vrot.slane %v230, 4
      %v232 = vadd.f32 %v230, %v231
      %v233 = vrot.slane %v232, 2
      %v234 = vadd.f32 %v232, %v233
      %v235 = vrot.slane %v234, 1
      %v236 = vadd.f32 %v234, %v235
      %v237 = vadd.f32 %v228, %v236
      %238 = vst [vmem:[#allocation3] sm:$0x1] %v237
      %v239 = vld [vmem:[#allocation4] sm:$0x1]
      %v240 = vsel %vm229, %v226, 0.0
      %v241 = vrot.slane %v240, 4
      %v242 = vadd.f32 %v240, %v241
      %v243 = vrot.slane %v242, 2
      %v244 = vadd.f32 %v242, %v243
      %v245 = vrot.slane %v244, 1
      %v246 = vadd.f32 %v244, %v245
      %v247 = vadd.f32 %v239, %v246
      %248 = vst [vmem:[#allocation4] sm:$0x1] %v247
      %v249 = vmul.f32 %v200, %v220
      %v250 = vsub.f32 %v222, 1.0
      %v251 = vmul.f32 %v250, %v250
      %v252 = vsel %vm184, %v249, 0.0
      %v253 = vsel %vm184, %v251, 0.0
      %v254 = vmul.f32 %v253, %v252
      %v255 = vadd.f32 %v227, %v254
      %s256 = scalar_lea.vmem [#allocation3], 1
      %v257 = vld [vmem:[%s256] sm:$0x1]
      %v258 = vsel %vm229, %v252, 0.0
      %v259 = vrot.slane %v258, 4
      %v260 = vadd.f32 %v258, %v259
      %v261 = vrot.slane %v260, 2
      %v262 = vadd.f32 %v260, %v261
      %v263 = vrot.slane %v262, 1
      %v264 = vadd.f32 %v262, %v263
      %v265 = vadd.f32 %v257, %v264
      %266 = vst [vmem:[%s256] sm:$0x1] %v265
      %s267 = scalar_lea.vmem [#allocation4], 1
      %v268 = vld [vmem:[%s267] sm:$0x1]
      %v269 = vsel %vm229, %v253, 0.0
      %v270 = vrot.slane %v269, 4
      %v271 = vadd.f32 %v269, %v270
      %v272 = vrot.slane %v271, 2
      %v273 = vadd.f32 %v271, %v272
      %v274 = vrot.slane %v273, 1
      %v275 = vadd.f32 %v273, %v274
      %v276 = vadd.f32 %v268, %v275
      %277 = vst [vmem:[%s267] sm:$0x1] %v276
      %v278 = vmul.f32 %v203, %v220
      %v279 = vsub.f32 %v222, 2.0
      %v280 = vmul.f32 %v279, %v279
      %v281 = vsel %vm184, %v278, 0.0
      %v282 = vsel %vm184, %v280, 0.0
      %v283 = vmul.f32 %v282, %v281
      %v284 = vadd.f32 %v255, %v283
      %s285 = scalar_lea.vmem [#allocation3], 2
      %v286 = vld [vmem:[%s285] sm:$0x1]
      %v287 = vsel %vm229, %v281, 0.0
      %v288 = vrot.slane %v287, 4
      %v289 = vadd.f32 %v287, %v288
      %v290 = vrot.slane %v289, 2
      %v291 = vadd.f32 %v289, %v290
      %v292 = vrot.slane %v291, 1
      %v293 = vadd.f32 %v291, %v292
      %v294 = vadd.f32 %v286, %v293
      %295 = vst [vmem:[%s285] sm:$0x1] %v294
      %s296 = scalar_lea.vmem [#allocation4], 2
      %v297 = vld [vmem:[%s296] sm:$0x1]
      %v298 = vsel %vm229, %v282, 0.0
      %v299 = vrot.slane %v298, 4
      %v300 = vadd.f32 %v298, %v299
      %v301 = vrot.slane %v300, 2
      %v302 = vadd.f32 %v300, %v301
      %v303 = vrot.slane %v302, 1
      %v304 = vadd.f32 %v302, %v303
      %v305 = vadd.f32 %v297, %v304
      %306 = vst [vmem:[%s296] sm:$0x1] %v305
      %v307 = vld [vmem:[#allocation2] sm:$0x1]
      %v308 = vsel %vm229, %v284, 0.0
      %v309 = vrot.slane %v308, 4
      %v310 = vadd.f32 %v308, %v309
      %v311 = vrot.slane %v310, 2
      %v312 = vadd.f32 %v310, %v311
      %v313 = vrot.slane %v312, 1
      %v314 = vadd.f32 %v312, %v313
      %v315 = vadd.f32 %v307, %v314
      %316 = vst [vmem:[#allocation2] sm:$0x1] %v315
    $region25: #{tpu_custom_call.1} parent=1 // pred_fallthru
      _
    // Predicated region
    $region26: #{tpu_custom_call.1} parent=1 // pred_check
      %p317 = pneg %p30
    $region27: #{tpu_custom_call.1} parent=1 // pred_check_branch
      %319 = sbr.rel (%p317) target = $region29
    $region28: #{tpu_custom_call.1} parent=1 // pred_region
      %v320 = vld [vmem:[#allocation2] sm:$0x1]
      %vm321 = vcmask 1040384
      %v322 = vsel %vm321, %v320, 0.0
      %323 = vadd.xlane.f32.xlu0 %v322
      %v324 = vpop.xlane.xlu0 %323
      %v325 = vadd.f32 %v324, 0.0
      %v326 = vld [vmem:[#allocation3] sm:$0x1]
      %v327 = vsel %vm321, %v326, 0.0
      %328 = vadd.xlane.f32.xlu0 %v327
      %v329 = vpop.xlane.xlu0 %328
      %v330 = vadd.f32 %v329, 0.0
      %v331 = vld [vmem:[#allocation4] sm:$0x1]
      %v332 = vsel %vm321, %v331, 0.0
      %333 = vadd.xlane.f32.xlu0 %v332
      %v334 = vpop.xlane.xlu0 %333
      %v335 = vadd.f32 %v334, 0.0
      %v336 = vadd.f32 %v330, 0.0
      %v337 = vmul.f32 %v330, %v335
      %v338 = vadd.f32 %v337, 0.0
      %s339 = scalar_lea.vmem [#allocation3], 1
      %v340 = vld [vmem:[%s339] sm:$0x1]
      %v341 = vsel %vm321, %v340, 0.0
      %342 = vadd.xlane.f32.xlu0 %v341
      %v343 = vpop.xlane.xlu0 %342
      %v344 = vadd.f32 %v343, 0.0
      %s345 = scalar_lea.vmem [#allocation4], 1
      %v346 = vld [vmem:[%s345] sm:$0x1]
      %v347 = vsel %vm321, %v346, 0.0
      %348 = vadd.xlane.f32.xlu0 %v347
      %v349 = vpop.xlane.xlu0 %348
      %v350 = vadd.f32 %v349, 0.0
      %v351 = vadd.f32 %v336, %v344
      %v352 = vmul.f32 %v344, %v350
      %v353 = vadd.f32 %v338, %v352
      %s354 = scalar_lea.vmem [#allocation3], 2
      %v355 = vld [vmem:[%s354] sm:$0x1]
      %v356 = vsel %vm321, %v355, 0.0
      %357 = vadd.xlane.f32.xlu0 %v356
      %v358 = vpop.xlane.xlu0 %357
      %v359 = vadd.f32 %v358, 0.0
      %s360 = scalar_lea.vmem [#allocation4], 2
      %v361 = vld [vmem:[%s360] sm:$0x1]
      %v362 = vsel %vm321, %v361, 0.0
      %363 = vadd.xlane.f32.xlu0 %v362
      %v364 = vpop.xlane.xlu0 %363
      %v365 = vadd.f32 %v364, 0.0
      %v366 = vadd.f32 %v351, %v359
      %v367 = vmul.f32 %v359, %v365
      %v368 = vadd.f32 %v353, %v367
      %v369 = vrcp.pop %v366
      %v370 = vmul.f32 %v366, %v369
      %v371 = vsub.f32 1.0, %v370
      %v372 = vmul.f32 %v369, %v371
      %v373 = vadd.f32 %v369, %v372
      %vm374 = vweird.f32 %v366
      %vm375 = vweird.f32 %v369
      %vm376 = vmor %vm374, %vm375
      %v377 = vsel %vm376, %v369, %v373
      %v378 = vand.u32 2147483647, %v366
      %vm379 = vcmp.eq.f32.partialorder %v378, 8.507059e+37
      %v380 = vand.u32 %v366, 2147483648
      %v381 = vor.u32 1.1754944e-38, %v380
      %v382 = vsel %vm379, %v381, %v377
      %v383 = vmul.f32 %v368, %v382
      %v384 = vadd.f32 %v383, 1e-07
      %v385 = vrcp.pop %v384
      %v386 = vmul.f32 %v384, %v385
      %v387 = vsub.f32 1.0, %v386
      %v388 = vmul.f32 %v385, %v387
      %v389 = vadd.f32 %v385, %v388
      %vm390 = vweird.f32 %v384
      %vm391 = vweird.f32 %v385
      %vm392 = vmor %vm390, %vm391
      %v393 = vsel %vm392, %v385, %v389
      %v394 = vand.u32 2147483647, %v384
      %vm395 = vcmp.eq.f32.partialorder %v394, 8.507059e+37
      %v396 = vand.u32 %v384, 2147483648
      %v397 = vor.u32 1.1754944e-38, %v396
      %v398 = vsel %vm395, %v397, %v393
      %v399 = vmul.f32 %v325, %v398
      %vm400 = vcmask 0
      %401 = vst.msk [vmem:[#allocation10] sm:$0x1] %vm400, %v399
    $region29: #{tpu_custom_call.1} parent=1 // pred_fallthru
      _
    // Predicated region
    $region30: #{tpu_custom_call.1} parent=1 // pred_check
      _
    $region31: #{tpu_custom_call.1} parent=1 // pred_check_branch
      %403 = sbr.rel (0) target = $region33
    $region32: #{tpu_custom_call.1} parent=1 // pred_region
      %405 = vsyncadd [#allocation9], 0
      %s407 = sshll.u32 [#allocation10], 4
      %s408 = int_to_ptr.vmem [resolvable:$true] %s407
      %s409 = sshll.u32 %s3, 4
      %s410 = int_to_ptr.hbm [resolvable:$true] %s409
      %412 = dma.vmem_to_hbm [thread:$0]  %s408, 16, %s410, [#allocation9]
    $region33: #{tpu_custom_call.1} parent=1 // pred_fallthru
      _
    // Predicated region
    $region34: #{tpu_custom_call.1} parent=1 // pred_check
      _
    $region35: #{tpu_custom_call.1} parent=1 // pred_check_branch
      %414 = sbr.rel (0) target = $region37
    $region36: #{tpu_custom_call.1} parent=1 // pred_region
      %416 = dma.done [#allocation9], 16
    $region37: #{tpu_custom_call.1} parent=1 // pred_fallthru
      _
    %417 = vsyncpa [#allocation8], 1
    %418 = vsyncpa [#allocation9], 1

</llo_original>
